<compile_context>
chip_gen: v7x
topology: tpu7x:2x2x1
jax: 0.10.0
libtpu: 0.0.40
codegen_flags: <defaults>
</compile_context>

<pallas_src>
import math
import jax
import jax.numpy as jnp
from jax.experimental import pallas as pl
from jax.experimental.pallas import tpu as pltpu


# -------------------- config (mirrors args in the PyTorch script) ----------
FACTOR_NUM_MF = 8                       # args.factor_num
LAYERS = [64, 32, 16, 8]                # args.layers
FACTOR_NUM_MLP = LAYERS[0] // 2         # 32
NUM_USERS = 32
NUM_ITEMS = 48
BATCH = 8

TILE_B = 128                            # batch tile on the lane axis


# -------------------- Pallas kernel -----------------------------------------
def neumf_kernel(u_mlp_ref, i_mlp_ref, u_mf_ref, i_mf_ref,
                 w0u_ref, w0i_ref, b0_ref,
                 w1_ref, b1_ref,
                 w2_ref, b2_ref,
                 wa_mlp_ref, wa_mf_ref, ba_ref,
                 out_ref):
    f32 = jnp.float32

    # fc layer 0 (concat-free): W0 @ [u; i] == W0[:, :32] @ u + W0[:, 32:] @ i
    h = jnp.dot(w0u_ref[...], u_mlp_ref[...], preferred_element_type=f32)
    h = h + jnp.dot(w0i_ref[...], i_mlp_ref[...], preferred_element_type=f32)
    h = jnp.maximum(h + b0_ref[...], 0.0)                      # (32, TILE_B)

    # fc layers 1, 2
    h = jnp.dot(w1_ref[...], h, preferred_element_type=f32) + b1_ref[...]
    h = jnp.maximum(h, 0.0)                                    # (16, TILE_B)
    h = jnp.dot(w2_ref[...], h, preferred_element_type=f32) + b2_ref[...]
    h = jnp.maximum(h, 0.0)                                    # (8, TILE_B)

    # GMF elementwise interaction
    mf = u_mf_ref[...] * i_mf_ref[...]                         # (8, TILE_B)

    # affine_output (out_features=1) as VPU multiply + sublane reduce,
    # concat-free: Wa @ [h; mf] == Wa[:, :8] @ h + Wa[:, 8:] @ mf
    logits = (jnp.sum(h * wa_mlp_ref[...], axis=0, keepdims=True)
              + jnp.sum(mf * wa_mf_ref[...], axis=0, keepdims=True)
              + ba_ref[...])                                   # (1, TILE_B)

    out_ref[...] = jax.nn.sigmoid(logits)


# -------------------- wrapper ------------------------------------------------
def neumf_forward(user_indices, item_indices, params):
    B = user_indices.shape[0]
    b_pad = pl.cdiv(B, TILE_B) * TILE_B
    pad = b_pad - B
    u_idx = jnp.pad(user_indices, (0, pad))   # padded with index 0 (valid row)
    i_idx = jnp.pad(item_indices, (0, pad))

    # embedding gathers (glue), emitted in feature-major [F, B_pad] layout
    u_mlp = jnp.take(params["emb_user_mlp"], u_idx, axis=0).T   # (32, b_pad)
    i_mlp = jnp.take(params["emb_item_mlp"], i_idx, axis=0).T   # (32, b_pad)
    u_mf = jnp.take(params["emb_user_mf"], u_idx, axis=0).T     # (8,  b_pad)
    i_mf = jnp.take(params["emb_item_mf"], i_idx, axis=0).T     # (8,  b_pad)

    inputs = (
        u_mlp, i_mlp, u_mf, i_mf,
        params["w0_u"], params["w0_i"], params["b0"],
        params["w1"], params["b1"],
        params["w2"], params["b2"],
        params["wa_mlp"], params["wa_mf"], params["ba"],
    )

    def act_spec(feat):
        # activations tile over the batch (lane) axis
        return pl.BlockSpec((feat, TILE_B), lambda j: (0, j))

    def resident(arr):
        # weights/biases: same block every step -> stay VMEM-resident
        return pl.BlockSpec(arr.shape, lambda j: (0, 0))

    in_specs = [
        act_spec(FACTOR_NUM_MLP), act_spec(FACTOR_NUM_MLP),
        act_spec(FACTOR_NUM_MF), act_spec(FACTOR_NUM_MF),
        resident(params["w0_u"]), resident(params["w0_i"]), resident(params["b0"]),
        resident(params["w1"]), resident(params["b1"]),
        resident(params["w2"]), resident(params["b2"]),
        resident(params["wa_mlp"]), resident(params["wa_mf"]), resident(params["ba"]),
    ]

    flops = 2 * b_pad * (LAYERS[0] * LAYERS[1]
                         + LAYERS[1] * LAYERS[2]
                         + LAYERS[2] * LAYERS[3]
                         + (LAYERS[3] + FACTOR_NUM_MF))
    bytes_accessed = 4 * (sum(int(x.size) for x in inputs) + b_pad)

    rating = pl.pallas_call(
        neumf_kernel,
        out_shape=jax.ShapeDtypeStruct((1, b_pad), jnp.float32),
        grid=(b_pad // TILE_B,),
        in_specs=in_specs,
        out_specs=pl.BlockSpec((1, TILE_B), lambda j: (0, j)),
        compiler_params=pltpu.CompilerParams(
            dimension_semantics=("parallel",)),
        cost_estimate=pl.CostEstimate(
            flops=flops, transcendentals=b_pad, bytes_accessed=bytes_accessed),
    )(*inputs)

    # matches `rating.squeeze()` in PyTorch (drop batch padding first)
    return rating[0, :B]


# -------------------- deterministic parameter init --------------------------
def xavier_uniform(key, shape):
    fan_out, fan_in = shape
    bound = math.sqrt(6.0 / (fan_in + fan_out))
    return jax.random.uniform(key, shape, jnp.float32, -bound, bound)


def init_params(key):
    ks = jax.random.split(key, 8)
    # Raw PyTorch-style weights [out, in], then pre-split / reshape once so the
    # kernel never transposes or concatenates.
    w0 = xavier_uniform(ks[4], (LAYERS[1], LAYERS[0]))          # (32, 64)
    wa = xavier_uniform(ks[7], (1, LAYERS[-1] + FACTOR_NUM_MF))  # (1, 16)
    params = {
        "emb_user_mlp": 0.01 * jax.random.normal(ks[0], (NUM_USERS, FACTOR_NUM_MLP), jnp.float32),
        "emb_item_mlp": 0.01 * jax.random.normal(ks[1], (NUM_ITEMS, FACTOR_NUM_MLP), jnp.float32),
        "emb_user_mf":  0.01 * jax.random.normal(ks[2], (NUM_USERS, FACTOR_NUM_MF), jnp.float32),
        "emb_item_mf":  0.01 * jax.random.normal(ks[3], (NUM_ITEMS, FACTOR_NUM_MF), jnp.float32),
        # fc layer 0 split column-wise into user / item halves
        "w0_u": w0[:, :FACTOR_NUM_MLP],                          # (32, 32)
        "w0_i": w0[:, FACTOR_NUM_MLP:],                          # (32, 32)
        "b0": jnp.zeros((LAYERS[1], 1), jnp.float32),
        "w1": xavier_uniform(ks[5], (LAYERS[2], LAYERS[1])),     # (16, 32)
        "b1": jnp.zeros((LAYERS[2], 1), jnp.float32),
        "w2": xavier_uniform(ks[6], (LAYERS[3], LAYERS[2])),     # (8, 16)
        "b2": jnp.zeros((LAYERS[3], 1), jnp.float32),
        # affine_output split into MLP / GMF halves, as column vectors
        "wa_mlp": wa[:, :LAYERS[-1]].T,                          # (8, 1)
        "wa_mf":  wa[:, LAYERS[-1]:].T,                          # (8, 1)
        "ba": jnp.zeros((1, 1), jnp.float32),
    }
    return params


if __name__ == "__main__":
    key = jax.random.PRNGKey(0)
    pkey, ukey, ikey = jax.random.split(key, 3)
    params = init_params(pkey)

    user_indices = jax.random.randint(ukey, (BATCH,), 0, NUM_USERS, dtype=jnp.int32)
    item_indices = jax.random.randint(ikey, (BATCH,), 0, NUM_ITEMS, dtype=jnp.int32)

    rating = neumf_forward(user_indices, item_indices, params)
    rating = jax.block_until_ready(rating)

    assert rating.shape == (BATCH,)
    assert bool(jnp.all((rating > 0.0) & (rating < 1.0)))
    print("KERNEL_OK")
</pallas_src>

<mosaic_0001>
module attributes {stable_mosaic.version = 11 : i64} {
  func.func @neumf_kernel(%arg0: i32, %arg1: memref<32x128xf32, #tpu.memory_space<vmem>>, %arg2: memref<32x128xf32, #tpu.memory_space<vmem>>, %arg3: memref<8x128xf32, #tpu.memory_space<vmem>>, %arg4: memref<8x128xf32, #tpu.memory_space<vmem>>, %arg5: memref<32x32xf32, #tpu.memory_space<vmem>>, %arg6: memref<32x32xf32, #tpu.memory_space<vmem>>, %arg7: memref<32x1xf32, #tpu.memory_space<vmem>>, %arg8: memref<16x32xf32, #tpu.memory_space<vmem>>, %arg9: memref<16x1xf32, #tpu.memory_space<vmem>>, %arg10: memref<8x16xf32, #tpu.memory_space<vmem>>, %arg11: memref<8x1xf32, #tpu.memory_space<vmem>>, %arg12: memref<8x1xf32, #tpu.memory_space<vmem>>, %arg13: memref<8x1xf32, #tpu.memory_space<vmem>>, %arg14: memref<1x1xf32, #tpu.memory_space<vmem>>, %arg15: memref<1x128xf32, #tpu.memory_space<vmem>>) attributes {dimension_semantics = [#tpu.dimension_semantics<parallel>], iteration_bounds = array<i64: 1>, scalar_prefetch = 0 : i64, scratch_operands = 0 : i64, tpu.core_type = #tpu.core_type<tc>, window_params = [{transform_indices = @transform_0, window_bounds = array<i64: 32, 128>}, {transform_indices = @transform_1, window_bounds = array<i64: 32, 128>}, {transform_indices = @transform_2, window_bounds = array<i64: 8, 128>}, {transform_indices = @transform_3, window_bounds = array<i64: 8, 128>}, {pipeline_mode = #tpu.pipeline_mode<synchronous>, transform_indices = @transform_4, window_bounds = array<i64: 32, 32>}, {pipeline_mode = #tpu.pipeline_mode<synchronous>, transform_indices = @transform_5, window_bounds = array<i64: 32, 32>}, {pipeline_mode = #tpu.pipeline_mode<synchronous>, transform_indices = @transform_6, window_bounds = array<i64: 32, 1>}, {pipeline_mode = #tpu.pipeline_mode<synchronous>, transform_indices = @transform_7, window_bounds = array<i64: 16, 32>}, {pipeline_mode = #tpu.pipeline_mode<synchronous>, transform_indices = @transform_8, window_bounds = array<i64: 16, 1>}, {pipeline_mode = #tpu.pipeline_mode<synchronous>, transform_indices = @transform_9, window_bounds = array<i64: 8, 16>}, {pipeline_mode = #tpu.pipeline_mode<synchronous>, transform_indices = @transform_10, window_bounds = array<i64: 8, 1>}, {pipeline_mode = #tpu.pipeline_mode<synchronous>, transform_indices = @transform_11, window_bounds = array<i64: 8, 1>}, {pipeline_mode = #tpu.pipeline_mode<synchronous>, transform_indices = @transform_12, window_bounds = array<i64: 8, 1>}, {pipeline_mode = #tpu.pipeline_mode<synchronous>, transform_indices = @transform_13, window_bounds = array<i64: 1, 1>}, {transform_indices = @transform_14, window_bounds = array<i64: 1, 128>}]} {
    %c0 = arith.constant 0 : index
    %c0_0 = arith.constant 0 : index
    %0 = vector.load %arg5[%c0, %c0_0] : memref<32x32xf32, #tpu.memory_space<vmem>>, vector<32x32xf32>
    %c0_1 = arith.constant 0 : index
    %c0_2 = arith.constant 0 : index
    %1 = vector.load %arg1[%c0_1, %c0_2] : memref<32x128xf32, #tpu.memory_space<vmem>>, vector<32x128xf32>
    %cst = arith.constant dense<0.000000e+00> : vector<32x128xf32>
    %2 = tpu.matmul %0, %1, %cst {dimension_numbers = #tpu.dot_dimension_numbers<[1], [0], [0], [1], [0, 0, 1, 1], [], []>} : vector<32x32xf32>, vector<32x128xf32>, vector<32x128xf32> -> vector<32x128xf32>
    %c0_3 = arith.constant 0 : index
    %c0_4 = arith.constant 0 : index
    %3 = vector.load %arg6[%c0_3, %c0_4] : memref<32x32xf32, #tpu.memory_space<vmem>>, vector<32x32xf32>
    %c0_5 = arith.constant 0 : index
    %c0_6 = arith.constant 0 : index
    %4 = vector.load %arg2[%c0_5, %c0_6] : memref<32x128xf32, #tpu.memory_space<vmem>>, vector<32x128xf32>
    %cst_7 = arith.constant dense<0.000000e+00> : vector<32x128xf32>
    %5 = tpu.matmul %3, %4, %cst_7 {dimension_numbers = #tpu.dot_dimension_numbers<[1], [0], [0], [1], [0, 0, 1, 1], [], []>} : vector<32x32xf32>, vector<32x128xf32>, vector<32x128xf32> -> vector<32x128xf32>
    %6 = arith.addf %2, %5 : vector<32x128xf32>
    %c0_8 = arith.constant 0 : index
    %c0_9 = arith.constant 0 : index
    %7 = vector.load %arg7[%c0_8, %c0_9] : memref<32x1xf32, #tpu.memory_space<vmem>>, vector<32x1xf32>
    %8 = vector.broadcast %7 : vector<32x1xf32> to vector<32x128xf32>
    %9 = arith.addf %6, %8 : vector<32x128xf32>
    %cst_10 = arith.constant 0.000000e+00 : f32
    %10 = vector.broadcast %cst_10 : f32 to vector<32x128xf32>
    %11 = arith.maximumf %9, %10 : vector<32x128xf32>
    %c0_11 = arith.constant 0 : index
    %c0_12 = arith.constant 0 : index
    %12 = vector.load %arg8[%c0_11, %c0_12] : memref<16x32xf32, #tpu.memory_space<vmem>>, vector<16x32xf32>
    %cst_13 = arith.constant dense<0.000000e+00> : vector<16x128xf32>
    %13 = tpu.matmul %12, %11, %cst_13 {dimension_numbers = #tpu.dot_dimension_numbers<[1], [0], [0], [1], [0, 0, 1, 1], [], []>} : vector<16x32xf32>, vector<32x128xf32>, vector<16x128xf32> -> vector<16x128xf32>
    %c0_14 = arith.constant 0 : index
    %c0_15 = arith.constant 0 : index
    %14 = vector.load %arg9[%c0_14, %c0_15] : memref<16x1xf32, #tpu.memory_space<vmem>>, vector<16x1xf32>
    %15 = vector.broadcast %14 : vector<16x1xf32> to vector<16x128xf32>
    %16 = arith.addf %13, %15 : vector<16x128xf32>
    %cst_16 = arith.constant 0.000000e+00 : f32
    %17 = vector.broadcast %cst_16 : f32 to vector<16x128xf32>
    %18 = arith.maximumf %16, %17 : vector<16x128xf32>
    %c0_17 = arith.constant 0 : index
    %c0_18 = arith.constant 0 : index
    %19 = vector.load %arg10[%c0_17, %c0_18] : memref<8x16xf32, #tpu.memory_space<vmem>>, vector<8x16xf32>
    %cst_19 = arith.constant dense<0.000000e+00> : vector<8x128xf32>
    %20 = tpu.matmul %19, %18, %cst_19 {dimension_numbers = #tpu.dot_dimension_numbers<[1], [0], [0], [1], [0, 0, 1, 1], [], []>} : vector<8x16xf32>, vector<16x128xf32>, vector<8x128xf32> -> vector<8x128xf32>
    %c0_20 = arith.constant 0 : index
    %c0_21 = arith.constant 0 : index
    %21 = vector.load %arg11[%c0_20, %c0_21] : memref<8x1xf32, #tpu.memory_space<vmem>>, vector<8x1xf32>
    %22 = vector.broadcast %21 : vector<8x1xf32> to vector<8x128xf32>
    %23 = arith.addf %20, %22 : vector<8x128xf32>
    %cst_22 = arith.constant 0.000000e+00 : f32
    %24 = vector.broadcast %cst_22 : f32 to vector<8x128xf32>
    %25 = arith.maximumf %23, %24 : vector<8x128xf32>
    %c0_23 = arith.constant 0 : index
    %c0_24 = arith.constant 0 : index
    %26 = vector.load %arg3[%c0_23, %c0_24] : memref<8x128xf32, #tpu.memory_space<vmem>>, vector<8x128xf32>
    %c0_25 = arith.constant 0 : index
    %c0_26 = arith.constant 0 : index
    %27 = vector.load %arg4[%c0_25, %c0_26] : memref<8x128xf32, #tpu.memory_space<vmem>>, vector<8x128xf32>
    %28 = arith.mulf %26, %27 : vector<8x128xf32>
    %c0_27 = arith.constant 0 : index
    %c0_28 = arith.constant 0 : index
    %29 = vector.load %arg12[%c0_27, %c0_28] : memref<8x1xf32, #tpu.memory_space<vmem>>, vector<8x1xf32>
    %30 = vector.broadcast %29 : vector<8x1xf32> to vector<8x128xf32>
    %31 = arith.mulf %25, %30 : vector<8x128xf32>
    %cst_29 = arith.constant dense<0.000000e+00> : vector<128xf32>
    %32 = vector.multi_reduction <add>, %31, %cst_29 [0] : vector<8x128xf32> to vector<128xf32>
    %33 = vector.shape_cast %32 : vector<128xf32> to vector<1x128xf32>
    %c0_30 = arith.constant 0 : index
    %c0_31 = arith.constant 0 : index
    %34 = vector.load %arg13[%c0_30, %c0_31] : memref<8x1xf32, #tpu.memory_space<vmem>>, vector<8x1xf32>
    %35 = vector.broadcast %34 : vector<8x1xf32> to vector<8x128xf32>
    %36 = arith.mulf %28, %35 : vector<8x128xf32>
    %cst_32 = arith.constant dense<0.000000e+00> : vector<128xf32>
    %37 = vector.multi_reduction <add>, %36, %cst_32 [0] : vector<8x128xf32> to vector<128xf32>
    %38 = vector.shape_cast %37 : vector<128xf32> to vector<1x128xf32>
    %39 = arith.addf %33, %38 : vector<1x128xf32>
    %c0_33 = arith.constant 0 : index
    %c0_34 = arith.constant 0 : index
    %40 = vector.load %arg14[%c0_33, %c0_34] : memref<1x1xf32, #tpu.memory_space<vmem>>, vector<1x1xf32>
    %41 = vector.broadcast %40 : vector<1x1xf32> to vector<1x128xf32>
    %42 = arith.addf %39, %41 : vector<1x128xf32>
    %43 = arith.negf %42 : vector<1x128xf32>
    %44 = math.exp %43 : vector<1x128xf32>
    %cst_35 = arith.constant 1.000000e+00 : f32
    %45 = vector.broadcast %cst_35 : f32 to vector<1x128xf32>
    %46 = arith.addf %45, %44 : vector<1x128xf32>
    %47 = arith.divf %45, %46 : vector<1x128xf32>
    %c0_36 = arith.constant 0 : index
    %c0_37 = arith.constant 0 : index
    %48 = vector.load %arg15[%c0_36, %c0_37] : memref<1x128xf32, #tpu.memory_space<vmem>>, vector<1x128xf32>
    tpu.vector_store %arg15[%c0_36, %c0_37], %47 {strides = array<i32>} : memref<1x128xf32, #tpu.memory_space<vmem>>, vector<1x128xf32>,
    return
  }
  func.func @transform_0(%arg0: i32) -> (i32, i32) {
    %c0_i32 = arith.constant 0 : i32
    %c0_i32_0 = arith.constant 0 : i32
    return %c0_i32, %arg0 : i32, i32
  }
  func.func @transform_1(%arg0: i32) -> (i32, i32) {
    %c0_i32 = arith.constant 0 : i32
    %c0_i32_0 = arith.constant 0 : i32
    return %c0_i32, %arg0 : i32, i32
  }
  func.func @transform_2(%arg0: i32) -> (i32, i32) {
    %c0_i32 = arith.constant 0 : i32
    %c0_i32_0 = arith.constant 0 : i32
    return %c0_i32, %arg0 : i32, i32
  }
  func.func @transform_3(%arg0: i32) -> (i32, i32) {
    %c0_i32 = arith.constant 0 : i32
    %c0_i32_0 = arith.constant 0 : i32
    return %c0_i32, %arg0 : i32, i32
  }
  func.func @transform_4(%arg0: i32) -> (i32, i32) {
    %c0_i32 = arith.constant 0 : i32
    %c0_i32_0 = arith.constant 0 : i32
    %c0_i32_1 = arith.constant 0 : i32
    return %c0_i32, %c0_i32_0 : i32, i32
  }
  func.func @transform_5(%arg0: i32) -> (i32, i32) {
    %c0_i32 = arith.constant 0 : i32
    %c0_i32_0 = arith.constant 0 : i32
    %c0_i32_1 = arith.constant 0 : i32
    return %c0_i32, %c0_i32_0 : i32, i32
  }
  func.func @transform_6(%arg0: i32) -> (i32, i32) {
    %c0_i32 = arith.constant 0 : i32
    %c0_i32_0 = arith.constant 0 : i32
    %c0_i32_1 = arith.constant 0 : i32
    return %c0_i32, %c0_i32_0 : i32, i32
  }
  func.func @transform_7(%arg0: i32) -> (i32, i32) {
    %c0_i32 = arith.constant 0 : i32
    %c0_i32_0 = arith.constant 0 : i32
    %c0_i32_1 = arith.constant 0 : i32
    return %c0_i32, %c0_i32_0 : i32, i32
  }
  func.func @transform_8(%arg0: i32) -> (i32, i32) {
    %c0_i32 = arith.constant 0 : i32
    %c0_i32_0 = arith.constant 0 : i32
    %c0_i32_1 = arith.constant 0 : i32
    return %c0_i32, %c0_i32_0 : i32, i32
  }
  func.func @transform_9(%arg0: i32) -> (i32, i32) {
    %c0_i32 = arith.constant 0 : i32
    %c0_i32_0 = arith.constant 0 : i32
    %c0_i32_1 = arith.constant 0 : i32
    return %c0_i32, %c0_i32_0 : i32, i32
  }
  func.func @transform_10(%arg0: i32) -> (i32, i32) {
    %c0_i32 = arith.constant 0 : i32
    %c0_i32_0 = arith.constant 0 : i32
    %c0_i32_1 = arith.constant 0 : i32
    return %c0_i32, %c0_i32_0 : i32, i32
  }
  func.func @transform_11(%arg0: i32) -> (i32, i32) {
    %c0_i32 = arith.constant 0 : i32
    %c0_i32_0 = arith.constant 0 : i32
    %c0_i32_1 = arith.constant 0 : i32
    return %c0_i32, %c0_i32_0 : i32, i32
  }
  func.func @transform_12(%arg0: i32) -> (i32, i32) {
    %c0_i32 = arith.constant 0 : i32
    %c0_i32_0 = arith.constant 0 : i32
    %c0_i32_1 = arith.constant 0 : i32
    return %c0_i32, %c0_i32_0 : i32, i32
  }
  func.func @transform_13(%arg0: i32) -> (i32, i32) {
    %c0_i32 = arith.constant 0 : i32
    %c0_i32_0 = arith.constant 0 : i32
    %c0_i32_1 = arith.constant 0 : i32
    return %c0_i32, %c0_i32_0 : i32, i32
  }
  func.func @transform_14(%arg0: i32) -> (i32, i32) {
    %c0_i32 = arith.constant 0 : i32
    %c0_i32_0 = arith.constant 0 : i32
    return %c0_i32, %arg0 : i32, i32
  }
}

</mosaic_0001>

<llo_original>
// kernel: tpu_custom_call.1
$region0: #{tpu_custom_call.1}
  #allocation0 [shape = 'u32[]', space=smem, size = 0x4, offset = 0x4, fixed_abs, tag = 'smem constant byte address 0x4 - core index']
  #allocation1 [shape = 'u32[144,128]{1,0:T(1,128)}', space=vmem, size = 0x12000, scoped, tag = 'internal scratch']
  #allocation2 [shape = 'f32[1,1]{1,0:T(1,128)S(1)}', space=vmem, size = 0x200, scoped, tag = 'scoped memory for tpu_custom_call.1']
  %s0 = inlined_call_operand.vmem [shape: f32[32,128], index: 0, kind: input, shape index: {}]
  %s1 = inlined_call_operand.vmem [shape: f32[32,128], index: 1, kind: input, shape index: {}]
  %s2 = inlined_call_operand.hbm [shape: f32[8,128], index: 2, kind: input, shape index: {}]
  %s3 = inlined_call_operand.hbm [shape: f32[8,128], index: 3, kind: input, shape index: {}]
  %s4 = inlined_call_operand.hbm [shape: f32[32,32], index: 4, kind: input, shape index: {}]
  %s5 = inlined_call_operand.vmem [shape: f32[32,32], index: 5, kind: input, shape index: {}]
  %s6 = inlined_call_operand.vmem [shape: f32[32,1], index: 6, kind: input, shape index: {}]
  %s7 = inlined_call_operand.hbm [shape: f32[16,32], index: 7, kind: input, shape index: {}]
  %s8 = inlined_call_operand.vmem [shape: f32[16,1], index: 8, kind: input, shape index: {}]
  %s9 = inlined_call_operand.vmem [shape: f32[8,16], index: 9, kind: input, shape index: {}]
  %s10 = inlined_call_operand.vmem [shape: f32[8,1], index: 10, kind: input, shape index: {}]
  %s11 = inlined_call_operand.vmem [shape: f32[8,1], index: 11, kind: input, shape index: {}]
  %s12 = inlined_call_operand.vmem [shape: f32[8,1], index: 12, kind: input, shape index: {}]
  %s13 = inlined_call_operand.<no memory space> [shape: f32[1,1], index: 13, kind: input, shape index: {}]
  %s14 = inlined_call_operand.hbm [shape: f32[1,128], index: 14, kind: output, shape index: {}]
  %s15 = sld [smem:[#allocation0]]
  $region82: #{tpu_custom_call.1} parent=0
    _
  %s17 = ssub.s32 1, %s15
  %s18 = scalar_select 0, %s17, %s15
  %v19 = vstv %s13
  %20 = vst [vmem:[#allocation2] sm:$0x1] %v19
  $region1: #{tpu_custom_call.1} parent=0
    #allocation3 [shape = 'u8[4096]{0}', space=vmem, size = 0x1000, scoped, tag = 'input window, operand 2, single buffered']
    #allocation4 [shape = 's32[1]{0}', space=sflag, size = 0x4, scoped, tag = 'scoped memory for tpu_custom_call.1']
    #allocation5 [shape = 's32[1]{0}', space=sflag, size = 0x4, scoped, tag = 'scoped memory for tpu_custom_call.1']
    #allocation6 [shape = 'u8[4096]{0}', space=vmem, size = 0x1000, scoped, tag = 'input window, operand 3, single buffered']
    #allocation7 [shape = 's32[1]{0}', space=sflag, size = 0x4, scoped, tag = 'scoped memory for tpu_custom_call.1']
    #allocation8 [shape = 'u8[16384]{0}', space=vmem, size = 0x4000, scoped, tag = 'input window, operand 4, single buffered']
    #allocation9 [shape = 'u8[8192]{0}', space=vmem, size = 0x2000, scoped, tag = 'input window, operand 7, single buffered']
    #allocation10 [shape = 's32[1]{0}', space=sflag, size = 0x4, scoped, tag = 'scoped memory for tpu_custom_call.1']
    #allocation11 [shape = 'u8[512]{0}', space=vmem, size = 0x400, scoped, tag = 'output window, operand 0, single buffered']
    %21 = vsyncpa [#allocation4], 0
    %22 = vsyncpa [#allocation7], 0
    %23 = vsyncpa [#allocation10], 0
    %24 = vsyncpa [#allocation5], 0
    // Predicated region
    $region2: #{tpu_custom_call.1} parent=1 // pred_check
      _
    $region3: #{tpu_custom_call.1} parent=1 // pred_check_branch
      %26 = sbr.rel (0) target = $region5
    $region4: #{tpu_custom_call.1} parent=1 // pred_region
      _
    $region5: #{tpu_custom_call.1} parent=1 // pred_fallthru
      _
    // Predicated region
    $region6: #{tpu_custom_call.1} parent=1 // pred_check
      _
    $region7: #{tpu_custom_call.1} parent=1 // pred_check_branch
      %28 = sbr.rel (0) target = $region9
    $region8: #{tpu_custom_call.1} parent=1 // pred_region
      _
    $region9: #{tpu_custom_call.1} parent=1 // pred_fallthru
      _
    // Predicated region
    $region10: #{tpu_custom_call.1} parent=1 // pred_check
      _
    $region11: #{tpu_custom_call.1} parent=1 // pred_check_branch
      %30 = sbr.rel (0) target = $region13
    $region12: #{tpu_custom_call.1} parent=1 // pred_region
      %s32 = ssub.s32 128, 128
      %33 = vsyncadd [#allocation4], %s32
      %s35 = sshll.u32 [#allocation3], 4
      %s36 = int_to_ptr.vmem [resolvable:$true] %s35
      %38 = dma.hbm_to_vmem [thread:$0]  %s2, 128, %s36, [#allocation4]
    $region13: #{tpu_custom_call.1} parent=1 // pred_fallthru
      _
    // Predicated region
    $region14: #{tpu_custom_call.1} parent=1 // pred_check
      _
    $region15: #{tpu_custom_call.1} parent=1 // pred_check_branch
      %40 = sbr.rel (0) target = $region17
    $region16: #{tpu_custom_call.1} parent=1 // pred_region
      %s42 = ssub.s32 128, 128
      %43 = vsyncadd [#allocation7], %s42
      %s45 = sshll.u32 [#allocation6], 4
      %s46 = int_to_ptr.vmem [resolvable:$true] %s45
      %48 = dma.hbm_to_vmem [thread:$0]  %s3, 128, %s46, [#allocation7]
    $region17: #{tpu_custom_call.1} parent=1 // pred_fallthru
      _
    // Predicated region
    $region18: #{tpu_custom_call.1} parent=1 // pred_check
      _
    $region19: #{tpu_custom_call.1} parent=1 // pred_check_branch
      %50 = sbr.rel (0) target = $region21
    $region20: #{tpu_custom_call.1} parent=1 // pred_region
      %s52 = ssub.s32 512, 512
      %53 = vsyncadd [#allocation7], %s52
      %s54 = sshll.u32 [#allocation8], 4
      %s55 = int_to_ptr.vmem [resolvable:$true] %s54
      %60 = dma.hbm_to_vmem [thread:$0]  %s4, 512, %s55, [#allocation7], 128, 128, 8
    $region21: #{tpu_custom_call.1} parent=1 // pred_fallthru
      _
    // Predicated region
    $region22: #{tpu_custom_call.1} parent=1 // pred_check
      _
    $region23: #{tpu_custom_call.1} parent=1 // pred_check_branch
      %62 = sbr.rel (0) target = $region25
    $region24: #{tpu_custom_call.1} parent=1 // pred_region
      _
    $region25: #{tpu_custom_call.1} parent=1 // pred_fallthru
      _
    // Predicated region
    $region26: #{tpu_custom_call.1} parent=1 // pred_check
      _
    $region27: #{tpu_custom_call.1} parent=1 // pred_check_branch
      %64 = sbr.rel (0) target = $region29
    $region28: #{tpu_custom_call.1} parent=1 // pred_region
      _
    $region29: #{tpu_custom_call.1} parent=1 // pred_fallthru
      _
    // Predicated region
    $region30: #{tpu_custom_call.1} parent=1 // pred_check
      _
    $region31: #{tpu_custom_call.1} parent=1 // pred_check_branch
      %66 = sbr.rel (0) target = $region33
    $region32: #{tpu_custom_call.1} parent=1 // pred_region
      %s68 = ssub.s32 256, 256
      %69 = vsyncadd [#allocation10], %s68
      %s70 = sshll.u32 [#allocation9], 4
      %s71 = int_to_ptr.vmem [resolvable:$true] %s70
      %76 = dma.hbm_to_vmem [thread:$0]  %s7, 256, %s71, [#allocation10], 128, 128, 8
    $region33: #{tpu_custom_call.1} parent=1 // pred_fallthru
      _
    // Predicated region
    $region34: #{tpu_custom_call.1} parent=1 // pred_check
      _
    $region35: #{tpu_custom_call.1} parent=1 // pred_check_branch
      %78 = sbr.rel (0) target = $region37
    $region36: #{tpu_custom_call.1} parent=1 // pred_region
      _
    $region37: #{tpu_custom_call.1} parent=1 // pred_fallthru
      _
    // Predicated region
    $region38: #{tpu_custom_call.1} parent=1 // pred_check
      _
    $region39: #{tpu_custom_call.1} parent=1 // pred_check_branch
      %80 = sbr.rel (0) target = $region41
    $region40: #{tpu_custom_call.1} parent=1 // pred_region
      _
    $region41: #{tpu_custom_call.1} parent=1 // pred_fallthru
      _
    // Predicated region
    $region42: #{tpu_custom_call.1} parent=1 // pred_check
      _
    $region43: #{tpu_custom_call.1} parent=1 // pred_check_branch
      %82 = sbr.rel (0) target = $region45
    $region44: #{tpu_custom_call.1} parent=1 // pred_region
      _
    $region45: #{tpu_custom_call.1} parent=1 // pred_fallthru
      _
    // Predicated region
    $region46: #{tpu_custom_call.1} parent=1 // pred_check
      _
    $region47: #{tpu_custom_call.1} parent=1 // pred_check_branch
      %84 = sbr.rel (0) target = $region49
    $region48: #{tpu_custom_call.1} parent=1 // pred_region
      _
    $region49: #{tpu_custom_call.1} parent=1 // pred_fallthru
      _
    // Predicated region
    $region50: #{tpu_custom_call.1} parent=1 // pred_check
      _
    $region51: #{tpu_custom_call.1} parent=1 // pred_check_branch
      %86 = sbr.rel (0) target = $region53
    $region52: #{tpu_custom_call.1} parent=1 // pred_region
      _
    $region53: #{tpu_custom_call.1} parent=1 // pred_fallthru
      _
    // Predicated region
    $region54: #{tpu_custom_call.1} parent=1 // pred_check
      _
    $region55: #{tpu_custom_call.1} parent=1 // pred_check_branch
      %88 = sbr.rel (0) target = $region57
    $region56: #{tpu_custom_call.1} parent=1 // pred_region
      _
    $region57: #{tpu_custom_call.1} parent=1 // pred_fallthru
      _
    // Predicated region
    $region58: #{tpu_custom_call.1} parent=1 // pred_check
      _
    $region59: #{tpu_custom_call.1} parent=1 // pred_check_branch
      %90 = sbr.rel (0) target = $region61
    $region60: #{tpu_custom_call.1} parent=1 // pred_region
      %91 = dma.done [#allocation4], 128
    $region61: #{tpu_custom_call.1} parent=1 // pred_fallthru
      _
    // Predicated region
    $region62: #{tpu_custom_call.1} parent=1 // pred_check
      _
    $region63: #{tpu_custom_call.1} parent=1 // pred_check_branch
      %93 = sbr.rel (0) target = $region65
    $region64: #{tpu_custom_call.1} parent=1 // pred_region
      %94 = dma.done [#allocation7], 128
    $region65: #{tpu_custom_call.1} parent=1 // pred_fallthru
      _
    // Predicated region
    $region66: #{tpu_custom_call.1} parent=1 // pred_check
      _
    $region67: #{tpu_custom_call.1} parent=1 // pred_check_branch
      %96 = sbr.rel (0) target = $region69
    $region68: #{tpu_custom_call.1} parent=1 // pred_region
      %97 = dma.done [#allocation7], 512
    $region69: #{tpu_custom_call.1} parent=1 // pred_fallthru
      _
    // Predicated region
    $region70: #{tpu_custom_call.1} parent=1 // pred_check
      _
    $region71: #{tpu_custom_call.1} parent=1 // pred_check_branch
      %99 = sbr.rel (0) target = $region73
    $region72: #{tpu_custom_call.1} parent=1 // pred_region
      %100 = dma.done [#allocation10], 256
    $region73: #{tpu_custom_call.1} parent=1 // pred_fallthru
      _
    %v101 = vld [vmem:[#allocation8] sm:$0xff]
    %v102 = vld [vmem:[#allocation8 + $0x8] sm:$0xff]
    %v103 = vld [vmem:[#allocation8 + $0x10] sm:$0xff]
    %v104 = vld [vmem:[#allocation8 + $0x18] sm:$0xff]
    %v105 = vld [vmem:[%s0] sm:$0xff]
    %v106 = vld [vmem:[%s0 + $0x8] sm:$0xff]
    %v107 = vld [vmem:[%s0 + $0x10] sm:$0xff]
    %v108 = vld [vmem:[%s0 + $0x18] sm:$0xff]
    %v109 = vld [vmem:[%s5] sm:$0xff]
    %v110 = vld [vmem:[%s5 + $0x8] sm:$0xff]
    %v111 = vld [vmem:[%s5 + $0x10] sm:$0xff]
    %v112 = vld [vmem:[%s5 + $0x18] sm:$0xff]
    %v113 = vld [vmem:[%s1] sm:$0xff]
    %v114 = vld [vmem:[%s1 + $0x8] sm:$0xff]
    %v115 = vld [vmem:[%s1 + $0x10] sm:$0xff]
    %v116 = vld [vmem:[%s1 + $0x18] sm:$0xff]
    %vm117 = vcmask 261120
    %v119 = vsel %vm117, %v109, 0
    %v122 = vsel %vm117, %v110, 0
    %v125 = vsel %vm117, %v111, 0
    %v128 = vsel %vm117, %v112, 0
    %130 = vmatprep.subr.mxu0 0.0
    %131 = vmatpush1.msra.mxu0 %v113
    %132 = vmatprep.subr.mxu0 0.0
    %133 = vmatpush1.msra.mxu0 %v114
    %134 = vmatprep.subr.mxu0 0.0
    %135 = vmatpush1.msra.mxu0 %v115
    %136 = vmatprep.subr.mxu0 0.0
    %137 = vmatpush1.msra.mxu0 %v116
    %138 = vmatprep.subr.mxu0 0.0
    %139 = vmatpush1.msra.mxu0 0.0
    %140 = vmatprep.subr.mxu0 0.0
    %141 = vmatpush1.msra.mxu0 0.0
    %142 = vmatprep.subr.mxu0 0.0
    %143 = vmatpush1.msra.mxu0 0.0
    %144 = vmatprep.subr.mxu0 0.0
    %145 = vmatpush1.msra.mxu0 0.0
    %146 = vmatprep.subr.mxu0 0.0
    %147 = vmatpush1.msra.mxu0 0.0
    %148 = vmatprep.subr.mxu0 0.0
    %149 = vmatpush1.msra.mxu0 0.0
    %150 = vmatprep.subr.mxu0 0.0
    %151 = vmatpush1.msra.mxu0 0.0
    %152 = vmatprep.subr.mxu0 0.0
    %153 = vmatpush1.msra.mxu0 0.0
    %154 = vmatprep.subr.mxu0 0.0
    %155 = vmatpush1.msra.mxu0 0.0
    %156 = vmatprep.subr.mxu0 0.0
    %157 = vmatpush1.msra.mxu0 0.0
    %158 = vmatprep.subr.mxu0 0.0
    %159 = vmatpush1.msra.mxu0 0.0
    %160 = vmatprep.subr.mxu0 0.0
    %161 = vmatpush1.msra.mxu0 0.0
    %162 = vmatprep.subr.mxu0 0.0
    %163 = vmatpush1.msra.mxu0 0.0
    %164 = vmatprep.subr.mxu0 0.0
    %165 = vmatpush1.msra.mxu0 0.0
    %166 = vmatprep.subr.mxu0 0.0
    %167 = vmatpush1.msra.mxu0 0.0
    %168 = vmatprep.subr.mxu0 0.0
    %169 = vmatpush1.msra.mxu0 0.0
    %170 = vmatprep.subr.mxu0 0.0
    %171 = vmatpush1.msra.mxu0 0.0
    %172 = vmatprep.subr.mxu0 0.0
    %173 = vmatpush1.msra.mxu0 0.0
    %174 = vmatprep.subr.mxu0 0.0
    %175 = vmatpush1.msra.mxu0 0.0
    %176 = vmatprep.subr.mxu0 0.0
    %177 = vmatpush1.msra.mxu0 0.0
    %178 = vmatprep.subr.mxu0 0.0
    %179 = vmatpush1.msra.mxu0 0.0
    %180 = vmatprep.subr.mxu0 0.0
    %181 = vmatpush1.msra.mxu0 0.0
    %182 = vmatprep.subr.mxu0 0.0
    %183 = vmatpush1.msra.mxu0 0.0
    %184 = vmatprep.subr.mxu0 0.0
    %185 = vmatpush1.msra.mxu0 0.0
    %186 = vmatprep.subr.mxu0 0.0
    %187 = vmatpush1.msra.mxu0 0.0
    %188 = vmatprep.subr.mxu0 0.0
    %189 = vmatpush1.msra.mxu0 0.0
    %190 = vmatprep.subr.mxu0 0.0
    %191 = vmatpush1.msra.mxu0 0.0
    %192 = vmatprep.subr.mxu0 0.0
    %193 = vmatpush1.msra.mxu0 0.0
    %194 = vmatprep.mubr.f32.mxu0 0.0
    %195 = vmatmul.mubr.f32.gmra.mrb[0].mxu0 %v119
    %v196 = vpop.f32.mrb[0].mxu0
    %v197 = vadd.f32 0.0, %v196
    %v198 = vpop.f32.mrb[0].mxu0
    %199 = vmatprep.mubr.f32.mxu0 0.0
    %200 = vmatmul.mubr.f32.gmra.mrb[0].mxu0 %v122
    %v201 = vpop.f32.mrb[0].mxu0
    %v202 = vadd.f32 0.0, %v201
    %v203 = vpop.f32.mrb[0].mxu0
    %204 = vmatprep.mubr.f32.mxu0 0.0
    %205 = vmatmul.mubr.f32.gmra.mrb[0].mxu0 %v125
    %v206 = vpop.f32.mrb[0].mxu0
    %v207 = vadd.f32 0.0, %v206
    %v208 = vpop.f32.mrb[0].mxu0
    %209 = vmatprep.mubr.f32.mxu0 0.0
    %210 = vmatmul.mubr.f32.gmra.mrb[0].mxu0 %v128
    %v211 = vpop.f32.mrb[0].mxu0
    %v212 = vadd.f32 0.0, %v211
    %v213 = vpop.f32.mrb[0].mxu0
    %214 = vdwg.mxu0
    %v216 = vsel %vm117, %v101, 0
    %v219 = vsel %vm117, %v102, 0
    %v222 = vsel %vm117, %v103, 0
    %v225 = vsel %vm117, %v104, 0
    %227 = vmatprep.subr.mxu0 0.0
    %228 = vmatpush1.msra.mxu0 %v105
    %229 = vmatprep.subr.mxu0 0.0
    %230 = vmatpush1.msra.mxu0 %v106
    %231 = vmatprep.subr.mxu0 0.0
    %232 = vmatpush1.msra.mxu0 %v107
    %233 = vmatprep.subr.mxu0 0.0
    %234 = vmatpush1.msra.mxu0 %v108
    %235 = vmatprep.subr.mxu0 0.0
    %236 = vmatpush1.msra.mxu0 0.0
    %237 = vmatprep.subr.mxu0 0.0
    %238 = vmatpush1.msra.mxu0 0.0
    %239 = vmatprep.subr.mxu0 0.0
    %240 = vmatpush1.msra.mxu0 0.0
    %241 = vmatprep.subr.mxu0 0.0
    %242 = vmatpush1.msra.mxu0 0.0
    %243 = vmatprep.subr.mxu0 0.0
    %244 = vmatpush1.msra.mxu0 0.0
    %245 = vmatprep.subr.mxu0 0.0
    %246 = vmatpush1.msra.mxu0 0.0
    %247 = vmatprep.subr.mxu0 0.0
    %248 = vmatpush1.msra.mxu0 0.0
    %249 = vmatprep.subr.mxu0 0.0
    %250 = vmatpush1.msra.mxu0 0.0
    %251 = vmatprep.subr.mxu0 0.0
    %252 = vmatpush1.msra.mxu0 0.0
    %253 = vmatprep.subr.mxu0 0.0
    %254 = vmatpush1.msra.mxu0 0.0
    %255 = vmatprep.subr.mxu0 0.0
    %256 = vmatpush1.msra.mxu0 0.0
    %257 = vmatprep.subr.mxu0 0.0
    %258 = vmatpush1.msra.mxu0 0.0
    %259 = vmatprep.subr.mxu0 0.0
    %260 = vmatpush1.msra.mxu0 0.0
    %261 = vmatprep.subr.mxu0 0.0
    %262 = vmatpush1.msra.mxu0 0.0
    %263 = vmatprep.subr.mxu0 0.0
    %264 = vmatpush1.msra.mxu0 0.0
    %265 = vmatprep.subr.mxu0 0.0
    %266 = vmatpush1.msra.mxu0 0.0
    %267 = vmatprep.subr.mxu0 0.0
    %268 = vmatpush1.msra.mxu0 0.0
    %269 = vmatprep.subr.mxu0 0.0
    %270 = vmatpush1.msra.mxu0 0.0
    %271 = vmatprep.subr.mxu0 0.0
    %272 = vmatpush1.msra.mxu0 0.0
    %273 = vmatprep.subr.mxu0 0.0
    %274 = vmatpush1.msra.mxu0 0.0
    %275 = vmatprep.subr.mxu0 0.0
    %276 = vmatpush1.msra.mxu0 0.0
    %277 = vmatprep.subr.mxu0 0.0
    %278 = vmatpush1.msra.mxu0 0.0
    %279 = vmatprep.subr.mxu0 0.0
    %280 = vmatpush1.msra.mxu0 0.0
    %281 = vmatprep.subr.mxu0 0.0
    %282 = vmatpush1.msra.mxu0 0.0
    %283 = vmatprep.subr.mxu0 0.0
    %284 = vmatpush1.msra.mxu0 0.0
    %285 = vmatprep.subr.mxu0 0.0
    %286 = vmatpush1.msra.mxu0 0.0
    %287 = vmatprep.subr.mxu0 0.0
    %288 = vmatpush1.msra.mxu0 0.0
    %289 = vmatprep.subr.mxu0 0.0
    %290 = vmatpush1.msra.mxu0 0.0
    %291 = vmatprep.mubr.f32.mxu0 0.0
    %292 = vmatmul.mubr.f32.gmra.mrb[0].mxu0 %v216
    %v293 = vpop.f32.mrb[0].mxu0
    %v294 = vadd.f32 %v197, %v293
    %v295 = vpop.f32.mrb[0].mxu0
    %296 = vmatprep.mubr.f32.mxu0 0.0
    %297 = vmatmul.mubr.f32.gmra.mrb[0].mxu0 %v219
    %v298 = vpop.f32.mrb[0].mxu0
    %v299 = vadd.f32 %v202, %v298
    %v300 = vpop.f32.mrb[0].mxu0
    %301 = vmatprep.mubr.f32.mxu0 0.0
    %302 = vmatmul.mubr.f32.gmra.mrb[0].mxu0 %v222
    %v303 = vpop.f32.mrb[0].mxu0
    %v304 = vadd.f32 %v207, %v303
    %v305 = vpop.f32.mrb[0].mxu0
    %306 = vmatprep.mubr.f32.mxu0 0.0
    %307 = vmatmul.mubr.f32.gmra.mrb[0].mxu0 %v225
    %v308 = vpop.f32.mrb[0].mxu0
    %v309 = vadd.f32 %v212, %v308
    %v310 = vpop.f32.mrb[0].mxu0
    %311 = vdwg.mxu0
    %v312 = vld [vmem:[%s6] sm:$0xff]
    %v313 = vld [vmem:[%s6 + $0x8] sm:$0xff]
    %v314 = vld [vmem:[%s6 + $0x10] sm:$0xff]
    %v315 = vld [vmem:[%s6 + $0x18] sm:$0xff]
    %317 = vset.pattern.permute.xlu0 0
    %318 = vperm.xlu0 %317, %v312
    %v319 = vpop.permute.xlu0 %318
    %322 = vset.pattern.permute.xlu0 0
    %323 = vperm.xlu0 %322, %v313
    %v324 = vpop.permute.xlu0 %323
    %327 = vset.pattern.permute.xlu0 0
    %328 = vperm.xlu0 %327, %v314
    %v329 = vpop.permute.xlu0 %328
    %332 = vset.pattern.permute.xlu0 0
    %333 = vperm.xlu0 %332, %v315
    %v334 = vpop.permute.xlu0 %333
    %v336 = vadd.f32 %v294, %v319
    %v337 = vadd.f32 %v299, %v324
    %v338 = vadd.f32 %v304, %v329
    %v339 = vadd.f32 %v309, %v334
    %v340 = vmax.f32 %v336, 0.0
    %v341 = vmax.f32 %v337, 0.0
    %v342 = vmax.f32 %v338, 0.0
    %v343 = vmax.f32 %v339, 0.0
    %v344 = vld [vmem:[#allocation9] sm:$0xff]
    %v345 = vld [vmem:[#allocation9 + $0x8] sm:$0xff]
    %v346 = vld [vmem:[%s8] sm:$0xff]
    %v347 = vld [vmem:[%s8 + $0x8] sm:$0xff]
    %349 = vset.pattern.permute.xlu0 0
    %350 = vperm.xlu0 %349, %v346
    %v351 = vpop.permute.xlu0 %350
    %354 = vset.pattern.permute.xlu0 0
    %355 = vperm.xlu0 %354, %v347
    %v356 = vpop.permute.xlu0 %355
    %v359 = vsel %vm117, %v344, 0
    %v362 = vsel %vm117, %v345, 0
    %364 = vmatprep.subr.mxu0 0.0
    %365 = vmatpush1.msra.mxu0 %v340
    %366 = vmatprep.subr.mxu0 0.0
    %367 = vmatpush1.msra.mxu0 %v341
    %368 = vmatprep.subr.mxu0 0.0
    %369 = vmatpush1.msra.mxu0 %v342
    %370 = vmatprep.subr.mxu0 0.0
    %371 = vmatpush1.msra.mxu0 %v343
    %372 = vmatprep.subr.mxu0 0.0
    %373 = vmatpush1.msra.mxu0 0.0
    %374 = vmatprep.subr.mxu0 0.0
    %375 = vmatpush1.msra.mxu0 0.0
    %376 = vmatprep.subr.mxu0 0.0
    %377 = vmatpush1.msra.mxu0 0.0
    %378 = vmatprep.subr.mxu0 0.0
    %379 = vmatpush1.msra.mxu0 0.0
    %380 = vmatprep.subr.mxu0 0.0
    %381 = vmatpush1.msra.mxu0 0.0
    %382 = vmatprep.subr.mxu0 0.0
    %383 = vmatpush1.msra.mxu0 0.0
    %384 = vmatprep.subr.mxu0 0.0
    %385 = vmatpush1.msra.mxu0 0.0
    %386 = vmatprep.subr.mxu0 0.0
    %387 = vmatpush1.msra.mxu0 0.0
    %388 = vmatprep.subr.mxu0 0.0
    %389 = vmatpush1.msra.mxu0 0.0
    %390 = vmatprep.subr.mxu0 0.0
    %391 = vmatpush1.msra.mxu0 0.0
    %392 = vmatprep.subr.mxu0 0.0
    %393 = vmatpush1.msra.mxu0 0.0
    %394 = vmatprep.subr.mxu0 0.0
    %395 = vmatpush1.msra.mxu0 0.0
    %396 = vmatprep.subr.mxu0 0.0
    %397 = vmatpush1.msra.mxu0 0.0
    %398 = vmatprep.subr.mxu0 0.0
    %399 = vmatpush1.msra.mxu0 0.0
    %400 = vmatprep.subr.mxu0 0.0
    %401 = vmatpush1.msra.mxu0 0.0
    %402 = vmatprep.subr.mxu0 0.0
    %403 = vmatpush1.msra.mxu0 0.0
    %404 = vmatprep.subr.mxu0 0.0
    %405 = vmatpush1.msra.mxu0 0.0
    %406 = vmatprep.subr.mxu0 0.0
    %407 = vmatpush1.msra.mxu0 0.0
    %408 = vmatprep.subr.mxu0 0.0
    %409 = vmatpush1.msra.mxu0 0.0
    %410 = vmatprep.subr.mxu0 0.0
    %411 = vmatpush1.msra.mxu0 0.0
    %412 = vmatprep.subr.mxu0 0.0
    %413 = vmatpush1.msra.mxu0 0.0
    %414 = vmatprep.subr.mxu0 0.0
    %415 = vmatpush1.msra.mxu0 0.0
    %416 = vmatprep.subr.mxu0 0.0
    %417 = vmatpush1.msra.mxu0 0.0
    %418 = vmatprep.subr.mxu0 0.0
    %419 = vmatpush1.msra.mxu0 0.0
    %420 = vmatprep.subr.mxu0 0.0
    %421 = vmatpush1.msra.mxu0 0.0
    %422 = vmatprep.subr.mxu0 0.0
    %423 = vmatpush1.msra.mxu0 0.0
    %424 = vmatprep.subr.mxu0 0.0
    %425 = vmatpush1.msra.mxu0 0.0
    %426 = vmatprep.subr.mxu0 0.0
    %427 = vmatpush1.msra.mxu0 0.0
    %428 = vmatprep.mubr.f32.mxu0 0.0
    %429 = vmatmul.mubr.f32.gmra.mrb[0].mxu0 %v359
    %v430 = vpop.f32.mrb[0].mxu0
    %v431 = vadd.f32 %v351, %v430
    %v432 = vpop.f32.mrb[0].mxu0
    %433 = vmatprep.mubr.f32.mxu0 0.0
    %434 = vmatmul.mubr.f32.gmra.mrb[0].mxu0 %v362
    %v435 = vpop.f32.mrb[0].mxu0
    %v436 = vadd.f32 %v356, %v435
    %v437 = vpop.f32.mrb[0].mxu0
    %438 = vdwg.mxu0
    %v439 = vmax.f32 %v431, 0.0
    %v440 = vmax.f32 %v436, 0.0
    %v441 = vld [vmem:[%s9] sm:$0xff]
    %v442 = vld [vmem:[%s10] sm:$0xff]
    %444 = vset.pattern.permute.xlu0 0
    %445 = vperm.xlu0 %444, %v442
    %v446 = vpop.permute.xlu0 %445
    %vm448 = vcmask 130048
    %v450 = vsel %vm448, %v441, 0
    %452 = vmatprep.subr.mxu0 0.0
    %453 = vmatpush1.msra.mxu0 %v439
    %454 = vmatprep.subr.mxu0 0.0
    %455 = vmatpush1.msra.mxu0 %v440
    %456 = vmatprep.subr.mxu0 0.0
    %457 = vmatpush1.msra.mxu0 0.0
    %458 = vmatprep.subr.mxu0 0.0
    %459 = vmatpush1.msra.mxu0 0.0
    %460 = vmatprep.subr.mxu0 0.0
    %461 = vmatpush1.msra.mxu0 0.0
    %462 = vmatprep.subr.mxu0 0.0
    %463 = vmatpush1.msra.mxu0 0.0
    %464 = vmatprep.subr.mxu0 0.0
    %465 = vmatpush1.msra.mxu0 0.0
    %466 = vmatprep.subr.mxu0 0.0
    %467 = vmatpush1.msra.mxu0 0.0
    %468 = vmatprep.subr.mxu0 0.0
    %469 = vmatpush1.msra.mxu0 0.0
    %470 = vmatprep.subr.mxu0 0.0
    %471 = vmatpush1.msra.mxu0 0.0
    %472 = vmatprep.subr.mxu0 0.0
    %473 = vmatpush1.msra.mxu0 0.0
    %474 = vmatprep.subr.mxu0 0.0
    %475 = vmatpush1.msra.mxu0 0.0
    %476 = vmatprep.subr.mxu0 0.0
    %477 = vmatpush1.msra.mxu0 0.0
    %478 = vmatprep.subr.mxu0 0.0
    %479 = vmatpush1.msra.mxu0 0.0
    %480 = vmatprep.subr.mxu0 0.0
    %481 = vmatpush1.msra.mxu0 0.0
    %482 = vmatprep.subr.mxu0 0.0
    %483 = vmatpush1.msra.mxu0 0.0
    %484 = vmatprep.subr.mxu0 0.0
    %485 = vmatpush1.msra.mxu0 0.0
    %486 = vmatprep.subr.mxu0 0.0
    %487 = vmatpush1.msra.mxu0 0.0
    %488 = vmatprep.subr.mxu0 0.0
    %489 = vmatpush1.msra.mxu0 0.0
    %490 = vmatprep.subr.mxu0 0.0
    %491 = vmatpush1.msra.mxu0 0.0
    %492 = vmatprep.subr.mxu0 0.0
    %493 = vmatpush1.msra.mxu0 0.0
    %494 = vmatprep.subr.mxu0 0.0
    %495 = vmatpush1.msra.mxu0 0.0
    %496 = vmatprep.subr.mxu0 0.0
    %497 = vmatpush1.msra.mxu0 0.0
    %498 = vmatprep.subr.mxu0 0.0
    %499 = vmatpush1.msra.mxu0 0.0
    %500 = vmatprep.subr.mxu0 0.0
    %501 = vmatpush1.msra.mxu0 0.0
    %502 = vmatprep.subr.mxu0 0.0
    %503 = vmatpush1.msra.mxu0 0.0
    %504 = vmatprep.subr.mxu0 0.0
    %505 = vmatpush1.msra.mxu0 0.0
    %506 = vmatprep.subr.mxu0 0.0
    %507 = vmatpush1.msra.mxu0 0.0
    %508 = vmatprep.subr.mxu0 0.0
    %509 = vmatpush1.msra.mxu0 0.0
    %510 = vmatprep.subr.mxu0 0.0
    %511 = vmatpush1.msra.mxu0 0.0
    %512 = vmatprep.subr.mxu0 0.0
    %513 = vmatpush1.msra.mxu0 0.0
    %514 = vmatprep.subr.mxu0 0.0
    %515 = vmatpush1.msra.mxu0 0.0
    %516 = vmatprep.mubr.f32.mxu0 0.0
    %517 = vmatmul.mubr.f32.gmra.mrb[0].mxu0 %v450
    %v518 = vpop.f32.mrb[0].mxu0
    %v519 = vadd.f32 %v446, %v518
    %v520 = vpop.f32.mrb[0].mxu0
    %521 = vdwg.mxu0
    %v522 = vmax.f32 %v519, 0.0
    %v523 = vld [vmem:[#allocation3] sm:$0xff]
    %v524 = vld [vmem:[#allocation6] sm:$0xff]
    %v525 = vmul.f32 %v523, %v524
    %v526 = vld [vmem:[%s11] sm:$0xff]
    %528 = vset.pattern.permute.xlu0 0
    %529 = vperm.xlu0 %528, %v526
    %v530 = vpop.permute.xlu0 %529
    %v532 = vmul.f32 %v522, %v530
    %v533 = vrot.slane %v532, 4
    %v534 = vadd.f32 %v532, %v533
    %v535 = vrot.slane %v534, 2
    %v536 = vadd.f32 %v534, %v535
    %v537 = vrot.slane %v536, 1
    %v538 = vadd.f32 %v536, %v537
    %v539 = vld [vmem:[%s12] sm:$0xff]
    %541 = vset.pattern.permute.xlu0 0
    %542 = vperm.xlu0 %541, %v539
    %v543 = vpop.permute.xlu0 %542
    %v545 = vmul.f32 %v525, %v543
    %v546 = vrot.slane %v545, 4
    %v547 = vadd.f32 %v545, %v546
    %v548 = vrot.slane %v547, 2
    %v549 = vadd.f32 %v547, %v548
    %v550 = vrot.slane %v549, 1
    %v551 = vadd.f32 %v549, %v550
    %v552 = vadd.f32 %v538, %v551
    %v553 = vld [vmem:[#allocation2] sm:$0x1]
    %555 = vset.pattern.permute.xlu0 0
    %556 = vperm.xlu0 %555, %v553
    %v557 = vpop.permute.xlu0 %556
    %v559 = vlaneseq
    %v560 = vshrl.u32 %v559, 7
    %v561 = vsub.s32 0, %v560
    %v562 = vrot.slane %v557, %v561
    %v563 = vadd.f32 %v552, %v562
    %v564 = vxor.u32 %v563, 2147483648
    %v565 = vmul.f32 %v564, 1.442695
    %v566 = vpow.pop %v565
    %v567 = vadd.f32 %v566, 1.0
    %v568 = vrcp.pop %v567
    %v569 = vmul.f32 1.0, %v568
    %570 = vst [vmem:[#allocation11] sm:$0x1] %v569
    // Predicated region
    $region74: #{tpu_custom_call.1} parent=1 // pred_check
      _
    $region75: #{tpu_custom_call.1} parent=1 // pred_check_branch
      %572 = sbr.rel (0) target = $region77
    $region76: #{tpu_custom_call.1} parent=1 // pred_region
      %s574 = ssub.s32 16, 16
      %575 = vsyncadd [#allocation5], %s574
      %s577 = sshll.u32 [#allocation11], 4
      %s578 = int_to_ptr.vmem [resolvable:$true] %s577
      %580 = dma.vmem_to_hbm [thread:$0]  %s578, 16, %s14, [#allocation5]
    $region77: #{tpu_custom_call.1} parent=1 // pred_fallthru
      _
    // Predicated region
    $region78: #{tpu_custom_call.1} parent=1 // pred_check
      _
    $region79: #{tpu_custom_call.1} parent=1 // pred_check_branch
      %582 = sbr.rel (0) target = $region81
    $region80: #{tpu_custom_call.1} parent=1 // pred_region
      %583 = dma.done [#allocation5], 16
    $region81: #{tpu_custom_call.1} parent=1 // pred_fallthru
      _
    %584 = vsyncpa [#allocation4], 1
    %585 = vsyncpa [#allocation7], 1
    %586 = vsyncpa [#allocation10], 1
    %587 = vsyncpa [#allocation5], 1

</llo_original>
